<compile_context>
chip_gen: v5e
topology: v5e:2x2
jax: 0.10.0
libtpu: 0.0.40
codegen_flags: <defaults>
</compile_context>

<pallas_src>
import functools

import jax
import jax.numpy as jnp
from jax import lax
from jax.experimental import pallas as pl
from jax.experimental.pallas import tpu as pltpu


def _round_up(n, m):
    return ((n + m - 1) // m) * m


def _logits_rowsum_kernel(scal_ref, x_ref, w_ref, logits_ref, rowsum_ref,
                          acc_ref, *, pad_cols):
    """Pass 1: K-tiled matmul producing logits (=10*cosa) and the row sums.

    grid = (i: batch tile [parallel], j: class tile [arbitrary],
            k: feature tile [arbitrary, innermost]).
    """
    j = pl.program_id(1)
    k = pl.program_id(2)

    @pl.when(k == 0)
    def _():
        acc_ref[...] = jnp.zeros_like(acc_ref)

    @pl.when((j == 0) & (k == 0))
    def _():
        # Every zero-padded class column contributes exp(0) = 1 to the row
        # sum; pre-subtract that exact constant instead of masking per tile.
        rowsum_ref[...] = jnp.full(rowsum_ref.shape, -float(pad_cols),
                                   rowsum_ref.dtype)

    # Operands arrive pre-normalized and pre-cast (bf16 on the fast path);
    # accumulate in f32 on the MXU.
    acc_ref[...] += jnp.dot(x_ref[...], w_ref[...],
                            preferred_element_type=jnp.float32)

    @pl.when(k == pl.num_programs(2) - 1)
    def _():
        dot = acc_ref[...]                               # = 10 * cosa, f32
        logits_ref[...] = dot.astype(logits_ref.dtype)   # intermediate for pass 2
        # exp(s * dot) == exp(10 * s * cosa)
        rowsum_ref[...] += jnp.sum(jnp.exp(scal_ref[0] * dot),
                                   axis=1, keepdims=True)


def _arcsoftmax_kernel(scal_ref, logits_ref, rowsum_ref, o_ref):
    """Pass 2: out = e_arc / (row_sum - e_cos + e_arc).  No matmul; VPU/EUP only."""
    dot = logits_ref[...].astype(jnp.float32)   # = 10 * cosa

    s_ = scal_ref[0]          # s
    c1 = scal_ref[1]          # s * cos(m)
    c2 = scal_ref[2]          # 10 * s * sin(m)

    e_cos = jnp.exp(s_ * dot)                   # exp(10*s*cosa)

    # sin(acos(cosa)) = sqrt(1 - u), u = cosa^2 = 0.01*dot^2 <= 0.01.
    # 2nd-order series keeps the EUP budget at 2 exps (+1 reciprocal); the
    # resulting exponent error (< ~1e-6 * s) is far below bf16 noise.
    u = 0.01 * (dot * dot)
    sina = 1.0 - 0.5 * u - 0.125 * (u * u)
    e_arc = jnp.exp(c1 * dot - c2 * sina)       # exp(10*s*cos(acos(cosa)+m))

    denom = rowsum_ref[...] - e_cos + e_arc     # (TM,1) broadcast over lanes
    o_ref[...] = e_arc * pl.reciprocal(denom, approx=True)


def arcsoftmax(x, w, s, m, *, tm=256, tc=1024, tk=512, use_bf16_matmul=True):
    """Pallas implementation of Arcsoftmax.forward(x, s, m) with weight w.

    x: (batch, feature_num), w: (feature_num, cls_num).
    Defaults (tm=256, tc=1024, tk=512) keep the per-call VMEM working set to a
    few MiB on every generation (v5e/v6e/v7x); tiles are clamped/padded for
    small inputs and tm is shrunk so the parallel batch axis has >=2 tiles
    (v7x megacore) whenever the batch allows it.
    """
    x = x.astype(jnp.float32)
    w = w.astype(jnp.float32)
    batch, feat = x.shape
    feat_w, cls = w.shape
    assert feat == feat_w, "x and w feature dims must match"

    # exp(s*dot) amplifies the ~0.4% bf16 rounding of the logits; at real
    # ArcFace scales fall back to f32 operands/logits (accuracy > bandwidth).
    if use_bf16_matmul and isinstance(s, (int, float)) and abs(float(s)) > 16.0:
        use_bf16_matmul = False
    op_dtype = jnp.bfloat16 if use_bf16_matmul else jnp.float32
    logit_dtype = op_dtype

    # --- hoisted normalization + operand cast (one XLA pass over x / w) ------
    x_n = (x * lax.rsqrt(jnp.maximum(jnp.sum(x * x, axis=1, keepdims=True),
                                     1e-24))).astype(op_dtype)
    w_n = (w * lax.rsqrt(jnp.maximum(jnp.sum(w * w, axis=0, keepdims=True),
                                     1e-24))).astype(op_dtype)

    # --- tile selection & lane-dense padding ----------------------------------
    sub = 16 if op_dtype == jnp.bfloat16 else 8   # native sublane packing
    tm = min(tm, _round_up(batch, sub))
    if batch >= 2 * sub and _round_up(batch, tm) // tm < 2:
        # v7x megacore: make sure the "parallel" batch axis has >= 2 blocks.
        tm = max(sub, _round_up((batch + 1) // 2, sub))
    tc = min(tc, _round_up(cls, 128))
    tk = min(tk, _round_up(feat, 128))
    batch_p = _round_up(batch, tm)
    cls_p = _round_up(cls, tc)
    feat_p = _round_up(feat, tk)

    x_n = jnp.pad(x_n, ((0, batch_p - batch), (0, feat_p - feat)))
    w_n = jnp.pad(w_n, ((0, feat_p - feat), (0, cls_p - cls)))

    # --- folded scalar constants (SMEM): exponents reuse dot = 10*cosa --------
    s_ = jnp.asarray(s, jnp.float32)
    m_ = jnp.asarray(m, jnp.float32)
    scal = jnp.stack([s_, s_ * jnp.cos(m_), 10.0 * s_ * jnp.sin(m_)]
                     ).astype(jnp.float32)

    gi, gj, gk = batch_p // tm, cls_p // tc, feat_p // tk
    smem_spec = pl.BlockSpec(memory_space=pltpu.MemorySpace.SMEM)

    # Working set after bf16 + K-tiling is only a few MiB; 40 MiB is generous
    # and leaves headroom under v7x's 64 MiB physical VMEM (fine on v5e/v6e).
    vmem_limit = 40 * 1024 * 1024

    ob = jnp.dtype(op_dtype).itemsize
    lb = jnp.dtype(logit_dtype).itemsize
    matmul_flops = 2 * batch_p * feat_p * cls_p

    # --- pass 1: logits intermediate + denominator row sums -------------------
    logits, row_sum = pl.pallas_call(
        functools.partial(_logits_rowsum_kernel, pad_cols=cls_p - cls),
        out_shape=(jax.ShapeDtypeStruct((batch_p, cls_p), logit_dtype),
                   jax.ShapeDtypeStruct((batch_p, 1), jnp.float32)),
        grid_spec=pltpu.PrefetchScalarGridSpec(
            num_scalar_prefetch=0,
            grid=(gi, gj, gk),
            in_specs=[smem_spec,
                      pl.BlockSpec((tm, tk), lambda i, j, k: (i, k)),
                      pl.BlockSpec((tk, tc), lambda i, j, k: (k, j))],
            out_specs=[pl.BlockSpec((tm, tc), lambda i, j, k: (i, j)),
                       pl.BlockSpec((tm, 1), lambda i, j, k: (i, 0))],
            scratch_shapes=[pltpu.VMEM((tm, tc), jnp.float32)]),
        compiler_params=pltpu.CompilerParams(
            dimension_semantics=("parallel", "arbitrary", "arbitrary"),
            vmem_limit_bytes=vmem_limit),
        cost_estimate=pl.CostEstimate(
            flops=matmul_flops + 2 * batch_p * cls_p,
            transcendentals=batch_p * cls_p,
            bytes_accessed=(batch_p * feat_p * ob + feat_p * cls_p * ob
                            + batch_p * cls_p * lb + batch_p * 4)),
    )(scal, x_n, w_n)

    # --- pass 2: per-tile outputs, no matmul, fully parallel grid --------------
    out_p = pl.pallas_call(
        _arcsoftmax_kernel,
        out_shape=jax.ShapeDtypeStruct((batch_p, cls_p), jnp.float32),
        grid_spec=pltpu.PrefetchScalarGridSpec(
            num_scalar_prefetch=0,
            grid=(gi, gj),
            in_specs=[smem_spec,
                      pl.BlockSpec((tm, tc), lambda i, j: (i, j)),
                      pl.BlockSpec((tm, 1), lambda i, j: (i, 0))],
            out_specs=pl.BlockSpec((tm, tc), lambda i, j: (i, j))),
        compiler_params=pltpu.CompilerParams(
            dimension_semantics=("parallel", "parallel"),
            vmem_limit_bytes=vmem_limit),
        cost_estimate=pl.CostEstimate(
            flops=12 * batch_p * cls_p,
            transcendentals=3 * batch_p * cls_p,
            bytes_accessed=batch_p * cls_p * (lb + 4) + batch_p * 4),
    )(scal, logits, row_sum)

    return out_p[:batch, :cls]


if __name__ == "__main__":
    # Small shapes consistent with the module: batch=8, feature_num=32, cls_num=16.
    batch, feature_num, cls_num = 8, 32, 16

    key = jax.random.PRNGKey(0)
    k_x, k_w = jax.random.split(key)
    x = jax.random.normal(k_x, (batch, feature_num), dtype=jnp.float32)
    w = jax.random.normal(k_w, (feature_num, cls_num), dtype=jnp.float32)

    s = 1.0   # scale
    m = 0.5   # margin

    out = arcsoftmax(x, w, s, m)
    jax.block_until_ready(out)

    # Plain-JAX f32 reference (same math as the PyTorch forward).
    x_n = x / jnp.maximum(jnp.linalg.norm(x, axis=1, keepdims=True), 1e-12)
    w_n = w / jnp.maximum(jnp.linalg.norm(w, axis=0, keepdims=True), 1e-12)
    cosa = (x_n @ w_n) / 10.0
    a = jnp.arccos(cosa)
    num = jnp.exp(s * jnp.cos(a + m) * 10.0)
    e_cos = jnp.exp(s * cosa * 10.0)
    ref = num / (jnp.sum(e_cos, axis=1, keepdims=True) - e_cos + num)

    assert out.shape == (batch, cls_num)
    max_err = jnp.max(jnp.abs(out - ref))
    # bf16 matmul/logits + approx reciprocal => loose but tight-enough tolerance.
    assert jnp.allclose(out, ref, rtol=2e-2, atol=2e-3), f"max abs err = {max_err}"

    print("KERNEL_OK")
</pallas_src>

<mosaic_0001>
module attributes {stable_mosaic.version = 11 : i64} {
  func.func @_logits_rowsum_kernel(%arg0: i32, %arg1: i32, %arg2: i32, %arg3: memref<3xf32, #tpu.memory_space<smem>>, %arg4: memref<16x128xbf16, #tpu.memory_space<vmem>>, %arg5: memref<128x128xbf16, #tpu.memory_space<vmem>>, %arg6: memref<16x128xbf16, #tpu.memory_space<vmem>>, %arg7: memref<16x1xf32, #tpu.memory_space<vmem>>, %arg8: memref<16x128xf32, #tpu.memory_space<vmem>>) attributes {dimension_semantics = [#tpu.dimension_semantics<parallel>, #tpu.dimension_semantics<arbitrary>, #tpu.dimension_semantics<arbitrary>], iteration_bounds = array<i64: 1, 1, 1>, scalar_prefetch = 0 : i64, scratch_operands = 1 : i64, tpu.core_type = #tpu.core_type<tc>, window_params = [{transform_indices = @transform_0, window_bounds = array<i64: 3>}, {transform_indices = @transform_1, window_bounds = array<i64: 16, 128>}, {transform_indices = @transform_2, window_bounds = array<i64: 128, 128>}, {transform_indices = @transform_3, window_bounds = array<i64: 16, 128>}, {transform_indices = @transform_4, window_bounds = array<i64: 16, 1>}]} {
    %c0_i32 = arith.constant 0 : i32
    %0 = arith.cmpi eq, %arg2, %c0_i32 : i32
    %1 = arith.extui %0 : i1 to i32
    %c0_i32_0 = arith.constant 0 : i32
    %2 = arith.cmpi ne, %1, %c0_i32_0 : i32
    scf.if %2 {
      %cst_13 = arith.constant 0.000000e+00 : f32
      %17 = vector.broadcast %cst_13 : f32 to vector<16x128xf32>
      %c0_14 = arith.constant 0 : index
      %c0_15 = arith.constant 0 : index
      %18 = vector.load %arg8[%c0_14, %c0_15] : memref<16x128xf32, #tpu.memory_space<vmem>>, vector<16x128xf32>
      tpu.vector_store %arg8[%c0_14, %c0_15], %17 {strides = array<i32>} : memref<16x128xf32, #tpu.memory_space<vmem>>, vector<16x128xf32>,
    } else {
    }
    %c0_i32_1 = arith.constant 0 : i32
    %3 = arith.cmpi eq, %arg1, %c0_i32_1 : i32
    %c0_i32_2 = arith.constant 0 : i32
    %4 = arith.cmpi eq, %arg2, %c0_i32_2 : i32
    %5 = arith.andi %3, %4 : i1
    %6 = arith.extui %5 : i1 to i32
    %c0_i32_3 = arith.constant 0 : i32
    %7 = arith.cmpi ne, %6, %c0_i32_3 : i32
    scf.if %7 {
      %cst_13 = arith.constant -1.120000e+02 : f32
      %17 = vector.broadcast %cst_13 : f32 to vector<16x1xf32>
      %c0_14 = arith.constant 0 : index
      %c0_15 = arith.constant 0 : index
      %18 = vector.load %arg7[%c0_14, %c0_15] : memref<16x1xf32, #tpu.memory_space<vmem>>, vector<16x1xf32>
      tpu.vector_store %arg7[%c0_14, %c0_15], %17 {strides = array<i32>} : memref<16x1xf32, #tpu.memory_space<vmem>>, vector<16x1xf32>,
    } else {
    }
    %c0 = arith.constant 0 : index
    %c0_4 = arith.constant 0 : index
    %8 = vector.load %arg8[%c0, %c0_4] : memref<16x128xf32, #tpu.memory_space<vmem>>, vector<16x128xf32>
    %c0_5 = arith.constant 0 : index
    %c0_6 = arith.constant 0 : index
    %9 = vector.load %arg4[%c0_5, %c0_6] : memref<16x128xbf16, #tpu.memory_space<vmem>>, vector<16x128xbf16>
    %c0_7 = arith.constant 0 : index
    %c0_8 = arith.constant 0 : index
    %10 = vector.load %arg5[%c0_7, %c0_8] : memref<128x128xbf16, #tpu.memory_space<vmem>>, vector<128x128xbf16>
    %cst = arith.constant dense<0.000000e+00> : vector<16x128xf32>
    %11 = tpu.matmul %9, %10, %cst {dimension_numbers = #tpu.dot_dimension_numbers<[1], [0], [0], [1], [0, 0, 1, 1], [], []>} : vector<16x128xbf16>, vector<128x128xbf16>, vector<16x128xf32> -> vector<16x128xf32>
    %12 = arith.addf %8, %11 : vector<16x128xf32>
    %c0_9 = arith.constant 0 : index
    %c0_10 = arith.constant 0 : index
    %13 = vector.load %arg8[%c0_9, %c0_10] : memref<16x128xf32, #tpu.memory_space<vmem>>, vector<16x128xf32>
    tpu.vector_store %arg8[%c0_9, %c0_10], %12 {strides = array<i32>} : memref<16x128xf32, #tpu.memory_space<vmem>>, vector<16x128xf32>,
    %c0_i32_11 = arith.constant 0 : i32
    %14 = arith.cmpi eq, %arg2, %c0_i32_11 : i32
    %15 = arith.extui %14 : i1 to i32
    %c0_i32_12 = arith.constant 0 : i32
    %16 = arith.cmpi ne, %15, %c0_i32_12 : i32
    scf.if %16 {
      %c0_13 = arith.constant 0 : index
      %c0_14 = arith.constant 0 : index
      %17 = vector.load %arg8[%c0_13, %c0_14] : memref<16x128xf32, #tpu.memory_space<vmem>>, vector<16x128xf32>
      %18 = arith.truncf %17 : vector<16x128xf32> to vector<16x128xbf16>
      %c0_15 = arith.constant 0 : index
      %c0_16 = arith.constant 0 : index
      %19 = vector.load %arg6[%c0_15, %c0_16] : memref<16x128xbf16, #tpu.memory_space<vmem>>, vector<16x128xbf16>
      tpu.vector_store %arg6[%c0_15, %c0_16], %18 {strides = array<i32>} : memref<16x128xbf16, #tpu.memory_space<vmem>>, vector<16x128xbf16>,
      %c0_17 = arith.constant 0 : index
      %c0_18 = arith.constant 0 : index
      %20 = vector.load %arg7[%c0_17, %c0_18] : memref<16x1xf32, #tpu.memory_space<vmem>>, vector<16x1xf32>
      %c0_19 = arith.constant 0 : index
      %21 = memref.load %arg3[%c0_19] : memref<3xf32, #tpu.memory_space<smem>>
      %22 = vector.broadcast %21 : f32 to vector<16x128xf32>
      %23 = arith.mulf %22, %17 : vector<16x128xf32>
      %24 = math.exp %23 : vector<16x128xf32>
      %cst_20 = arith.constant dense<0.000000e+00> : vector<16xf32>
      %25 = vector.multi_reduction <add>, %24, %cst_20 [1] : vector<16x128xf32> to vector<16xf32>
      %26 = vector.shape_cast %25 : vector<16xf32> to vector<16x1xf32>
      %27 = arith.addf %20, %26 : vector<16x1xf32>
      %c0_21 = arith.constant 0 : index
      %c0_22 = arith.constant 0 : index
      %28 = vector.load %arg7[%c0_21, %c0_22] : memref<16x1xf32, #tpu.memory_space<vmem>>, vector<16x1xf32>
      tpu.vector_store %arg7[%c0_21, %c0_22], %27 {strides = array<i32>} : memref<16x1xf32, #tpu.memory_space<vmem>>, vector<16x1xf32>,
    } else {
    }
    return
  }
  func.func @transform_0(%arg0: i32, %arg1: i32, %arg2: i32) -> i32 {
    %c0_i32 = arith.constant 0 : i32
    %c0_i32_0 = arith.constant 0 : i32
    return %c0_i32 : i32
  }
  func.func @transform_1(%arg0: i32, %arg1: i32, %arg2: i32) -> (i32, i32) {
    %c0_i32 = arith.constant 0 : i32
    return %arg0, %arg2 : i32, i32
  }
  func.func @transform_2(%arg0: i32, %arg1: i32, %arg2: i32) -> (i32, i32) {
    %c0_i32 = arith.constant 0 : i32
    return %arg2, %arg1 : i32, i32
  }
  func.func @transform_3(%arg0: i32, %arg1: i32, %arg2: i32) -> (i32, i32) {
    %c0_i32 = arith.constant 0 : i32
    return %arg0, %arg1 : i32, i32
  }
  func.func @transform_4(%arg0: i32, %arg1: i32, %arg2: i32) -> (i32, i32) {
    %c0_i32 = arith.constant 0 : i32
    %c0_i32_0 = arith.constant 0 : i32
    return %arg0, %c0_i32 : i32, i32
  }
}

</mosaic_0001>

<llo_original>
// kernel: tpu_custom_call.1
$region0: #{tpu_custom_call.1}
  #allocation0 [shape = 'u32[]', space=smem, size = 0x4, offset = 0x4, fixed_abs, tag = 'smem constant byte address 0x4 - core index']
  #allocation1 [shape = 'u32[72,128]{1,0:T(1,128)}', space=vmem, size = 0x9000, scoped, tag = 'internal scratch']
  #allocation2 [shape = 'f32[16,128]{1,0:T(8,128)}', space=vmem, size = 0x2000, scoped, tag = 'scratch operand']
  %s0 = inlined_call_operand.hbm [shape: f32[3], index: 0, kind: input, shape index: {}]
  %s1 = inlined_call_operand.hbm [shape: bf16[16,128], index: 1, kind: input, shape index: {}]
  %s2 = inlined_call_operand.hbm [shape: bf16[128,128], index: 2, kind: input, shape index: {}]
  %s3 = inlined_call_operand.hbm [shape: bf16[16,128], index: 3, kind: output, shape index: {0}]
  %s4 = inlined_call_operand.vmem [shape: f32[16,1], index: 4, kind: output, shape index: {1}]
  %5 = xla_tuple %s3, %s4
  %s6 = sld [smem:[#allocation0]]
  $region54: #{tpu_custom_call.1} parent=0
    _
  %s8 = ssub.s32 1, %s6
  %s9 = scalar_select 0, %s8, %s6
  $region1: #{tpu_custom_call.1} parent=0
    #allocation3 [shape = 'u8[512]{0}', space=smem, size = 0x200, scoped, tag = 'input window, operand 0, single buffered']
    #allocation4 [shape = 's32[1]{0}', space=sflag, size = 0x4, scoped, tag = 'scoped memory for tpu_custom_call.1']
    #allocation5 [shape = 's32[1]{0}', space=sflag, size = 0x4, scoped, tag = 'scoped memory for tpu_custom_call.1']
    #allocation6 [shape = 's32[1]{0}', space=sflag, size = 0x4, scoped, tag = 'scoped memory for tpu_custom_call.1']
    #allocation7 [shape = 'u8[4096]{0}', space=vmem, size = 0x1000, scoped, tag = 'input window, operand 1, single buffered']
    #allocation8 [shape = 'u8[32768]{0}', space=vmem, size = 0x8000, scoped, tag = 'input window, operand 2, single buffered']
    #allocation9 [shape = 's32[1]{0}', space=sflag, size = 0x4, scoped, tag = 'scoped memory for tpu_custom_call.1']
    #allocation10 [shape = 'u8[4096]{0}', space=vmem, size = 0x1000, scoped, tag = 'output window, operand 0, single buffered']
    %10 = vsyncpa [#allocation6], 0
    %11 = vsyncpa [#allocation4], 0
    %12 = vsyncpa [#allocation9], 0
    %13 = vsyncpa [#allocation5], 0
    // Predicated region
    $region2: #{tpu_custom_call.1} parent=1 // pred_check
      _
    $region3: #{tpu_custom_call.1} parent=1 // pred_check_branch
      %15 = sbr.rel (0) target = $region5
    $region4: #{tpu_custom_call.1} parent=1 // pred_region
      %17 = vsyncadd [#allocation6], 0
      %s19 = sshll.u32 %s0, 4
      %s20 = int_to_ptr.hbm [resolvable:$true] %s19
      %22 = dma.hbm_to_smem %s20, 16, [#allocation3], [#allocation6]
    $region5: #{tpu_custom_call.1} parent=1 // pred_fallthru
      _
    // Predicated region
    $region6: #{tpu_custom_call.1} parent=1 // pred_check
      _
    $region7: #{tpu_custom_call.1} parent=1 // pred_check_branch
      %24 = sbr.rel (0) target = $region9
    $region8: #{tpu_custom_call.1} parent=1 // pred_region
      %26 = vsyncadd [#allocation4], 0
      %s27 = sshll.u32 %s1, 4
      %s28 = int_to_ptr.hbm [resolvable:$true] %s27
      %s29 = sshll.u32 [#allocation7], 4
      %s30 = int_to_ptr.vmem [resolvable:$true] %s29
      %35 = dma.hbm_to_vmem [thread:$0]  %s28, 128, %s30, [#allocation4], 64, 64, 4
    $region9: #{tpu_custom_call.1} parent=1 // pred_fallthru
      _
    // Predicated region
    $region10: #{tpu_custom_call.1} parent=1 // pred_check
      _
    $region11: #{tpu_custom_call.1} parent=1 // pred_check_branch
      %37 = sbr.rel (0) target = $region13
    $region12: #{tpu_custom_call.1} parent=1 // pred_region
      %39 = vsyncadd [#allocation9], 0
      %s40 = sshll.u32 %s2, 4
      %s41 = int_to_ptr.hbm [resolvable:$true] %s40
      %s42 = sshll.u32 [#allocation8], 4
      %s43 = int_to_ptr.vmem [resolvable:$true] %s42
      %48 = dma.hbm_to_vmem [thread:$0]  %s41, 1024, %s43, [#allocation9], 64, 64, 4
    $region13: #{tpu_custom_call.1} parent=1 // pred_fallthru
      _
    // Predicated region
    $region14: #{tpu_custom_call.1} parent=1 // pred_check
      _
    $region15: #{tpu_custom_call.1} parent=1 // pred_check_branch
      %50 = sbr.rel (0) target = $region17
    $region16: #{tpu_custom_call.1} parent=1 // pred_region
      %52 = dma.done [#allocation6], 16
    $region17: #{tpu_custom_call.1} parent=1 // pred_fallthru
      _
    // Predicated region
    $region18: #{tpu_custom_call.1} parent=1 // pred_check
      _
    $region19: #{tpu_custom_call.1} parent=1 // pred_check_branch
      %54 = sbr.rel (0) target = $region21
    $region20: #{tpu_custom_call.1} parent=1 // pred_region
      %56 = dma.done [#allocation4], 128
    $region21: #{tpu_custom_call.1} parent=1 // pred_fallthru
      _
    // Predicated region
    $region22: #{tpu_custom_call.1} parent=1 // pred_check
      _
    $region23: #{tpu_custom_call.1} parent=1 // pred_check_branch
      %58 = sbr.rel (0) target = $region25
    $region24: #{tpu_custom_call.1} parent=1 // pred_region
      %60 = dma.done [#allocation9], 1024
    $region25: #{tpu_custom_call.1} parent=1 // pred_fallthru
      _
    %61 = sfence
    %p62 = scmp.eq.s32.totalorder 0, 0
    // Predicated region
    $region26: #{tpu_custom_call.1} parent=1 // pred_check
      %p63 = pneg %p62
    $region27: #{tpu_custom_call.1} parent=1 // pred_check_branch
      %65 = sbr.rel (%p63) target = $region29
    $region28: #{tpu_custom_call.1} parent=1 // pred_region
      %66 = vst [vmem:[#allocation2] sm:$0xff] 0.0
      %67 = vst [vmem:[#allocation2 + $0x8] sm:$0xff] 0.0
    $region29: #{tpu_custom_call.1} parent=1 // pred_fallthru
      _
    %p68 = scmp.eq.s32.totalorder 0, 0
    %p69 = pnand %p68, %p62
    %p70 = pneg %p69
    // Predicated region
    $region30: #{tpu_custom_call.1} parent=1 // pred_check
      _
    $region31: #{tpu_custom_call.1} parent=1 // pred_check_branch
      %72 = sbr.rel (%p69) target = $region33
    $region32: #{tpu_custom_call.1} parent=1 // pred_region
      %vm73 = vcmask 7168
      %74 = vst.msk [vmem:[%s4] sm:$0xff] %vm73, -112.0
      %75 = vst.msk [vmem:[%s4 + $0x8] sm:$0xff] %vm73, -112.0
    $region33: #{tpu_custom_call.1} parent=1 // pred_fallthru
      _
    %v76 = vld [vmem:[#allocation2] sm:$0xff]
    %v77 = vld [vmem:[#allocation2 + $0x8] sm:$0xff]
    %v78 = vld [vmem:[#allocation7] sm:$0xf]
    %v79 = vld [vmem:[#allocation7 + $0x4] sm:$0xf]
    %v80 = vld [vmem:[#allocation8] sm:$0xf]
    %v81 = vld [vmem:[#allocation8 + $0x4] sm:$0xf]
    %v82 = vld [vmem:[#allocation8 + $0x8] sm:$0xf]
    %v83 = vld [vmem:[#allocation8 + $0xc] sm:$0xf]
    %v84 = vld [vmem:[#allocation8 + $0x10] sm:$0xf]
    %v85 = vld [vmem:[#allocation8 + $0x14] sm:$0xf]
    %v86 = vld [vmem:[#allocation8 + $0x18] sm:$0xf]
    %v87 = vld [vmem:[#allocation8 + $0x1c] sm:$0xf]
    %v88 = vld [vmem:[#allocation8 + $0x20] sm:$0xf]
    %v89 = vld [vmem:[#allocation8 + $0x24] sm:$0xf]
    %v90 = vld [vmem:[#allocation8 + $0x28] sm:$0xf]
    %v91 = vld [vmem:[#allocation8 + $0x2c] sm:$0xf]
    %v92 = vld [vmem:[#allocation8 + $0x30] sm:$0xf]
    %v93 = vld [vmem:[#allocation8 + $0x34] sm:$0xf]
    %v94 = vld [vmem:[#allocation8 + $0x38] sm:$0xf]
    %v95 = vld [vmem:[#allocation8 + $0x3c] sm:$0xf]
    %v98 = vunpack.c.l.b16 %v78
    %v99 = vunpack.c.l.b16 %v79
    %v100 = vpack.c.b16 %v99, %v98
    %v118 = vunpack.c.l.b16 %v80
    %v119 = vunpack.c.l.b16 %v81
    %v120 = vunpack.c.l.b16 %v82
    %v121 = vunpack.c.l.b16 %v83
    %v122 = vunpack.c.l.b16 %v84
    %v123 = vunpack.c.l.b16 %v85
    %v124 = vunpack.c.l.b16 %v86
    %v125 = vunpack.c.l.b16 %v87
    %v126 = vunpack.c.l.b16 %v88
    %v127 = vunpack.c.l.b16 %v89
    %v128 = vunpack.c.l.b16 %v90
    %v129 = vunpack.c.l.b16 %v91
    %v130 = vunpack.c.l.b16 %v92
    %v131 = vunpack.c.l.b16 %v93
    %v132 = vunpack.c.l.b16 %v94
    %v133 = vunpack.c.l.b16 %v95
    %v134 = vpack.c.b16 %v119, %v118
    %v135 = vpack.c.b16 %v121, %v120
    %v136 = vpack.c.b16 %v123, %v122
    %v137 = vpack.c.b16 %v125, %v124
    %v138 = vpack.c.b16 %v127, %v126
    %v139 = vpack.c.b16 %v129, %v128
    %v140 = vpack.c.b16 %v131, %v130
    %v141 = vpack.c.b16 %v133, %v132
    %150 = vmatpush.bf16.msra.mxu0 %v141
    %151 = vmatpush.bf16.msra.mxu0 %v140
    %152 = vmatpush.bf16.msra.mxu0 %v139
    %153 = vmatpush.bf16.msra.mxu0 %v138
    %154 = vmatpush.bf16.msra.mxu0 %v137
    %155 = vmatpush.bf16.msra.mxu0 %v136
    %156 = vmatpush.bf16.msra.mxu0 %v135
    %157 = vmatpush.bf16.msra.mxu0 %v134
    %158 = vmatmul.bf16.gmra.mxu0 %v100
    %v159 = vpop.f32.mrf.mxu0
    %v160 = vadd.f32 0.0, %v159
    %v161 = vpop.f32.mrf.mxu0
    %v162 = vadd.f32 0.0, %v161
    %163 = vdwg.mxu0
    %v164 = vadd.f32 %v76, %v160
    %v165 = vadd.f32 %v77, %v162
    %166 = vst [vmem:[#allocation2] sm:$0xff] %v164
    %167 = vst [vmem:[#allocation2 + $0x8] sm:$0xff] %v165
    // Predicated region
    $region34: #{tpu_custom_call.1} parent=1 // pred_check
      %p168 = pneg %p62
    $region35: #{tpu_custom_call.1} parent=1 // pred_check_branch
      %170 = sbr.rel (%p168) target = $region37
    $region36: #{tpu_custom_call.1} parent=1 // pred_region
      %v171 = vld [vmem:[#allocation2] sm:$0xff]
      %v172 = vld [vmem:[#allocation2 + $0x8] sm:$0xff]
      %v173 = vpack.c.bf16 %v171, %v171
      %v174 = vpack.c.bf16 %v172, %v172
      %175 = vst [vmem:[#allocation10] sm:$0xf] %v173
      %176 = vst [vmem:[#allocation10 + $0x4] sm:$0xf] %v174
      %v177 = vld [vmem:[%s4] sm:$0xff]
      %v178 = vld [vmem:[%s4 + $0x8] sm:$0xff]
      %s179 = sld [smem:[#allocation3]]
      %v180 = vstv %s179
      %v181 = vmul.f32 %v180, %v171
      %v182 = vmul.f32 %v180, %v172
      %v183 = vmul.f32 %v181, 1.442695
      %v184 = vpow.pop %v183
      %v185 = vmul.f32 %v182, 1.442695
      %v186 = vpow.pop %v185
      %187 = vadd.xlane.f32.xlu0 %v184
      %v188 = vpop.xlane.xlu0 %187
      %189 = vadd.xlane.f32.xlu0 %v186
      %v190 = vpop.xlane.xlu0 %189
      %v191 = vadd.f32 %v177, %v188
      %v192 = vadd.f32 %v178, %v190
      %vm193 = vcmask 7168
      %194 = vst.msk [vmem:[%s4] sm:$0xff] %vm193, %v191
      %195 = vst.msk [vmem:[%s4 + $0x8] sm:$0xff] %vm193, %v192
    $region37: #{tpu_custom_call.1} parent=1 // pred_fallthru
      _
    // Predicated region
    $region38: #{tpu_custom_call.1} parent=1 // pred_check
      _
    $region39: #{tpu_custom_call.1} parent=1 // pred_check_branch
      %197 = sbr.rel (0) target = $region41
    $region40: #{tpu_custom_call.1} parent=1 // pred_region
      %199 = vsyncadd [#allocation5], 0
      %s200 = sshll.u32 [#allocation10], 4
      %s201 = int_to_ptr.vmem [resolvable:$true] %s200
      %s202 = sshll.u32 %s3, 4
      %s203 = int_to_ptr.hbm [resolvable:$true] %s202
      %208 = dma.vmem_to_hbm [thread:$0]  %s201, 128, %s203, [#allocation5], 64, 64, 4
    $region41: #{tpu_custom_call.1} parent=1 // pred_fallthru
      _
    // Predicated region
    $region42: #{tpu_custom_call.1} parent=1 // pred_check
      _
    $region43: #{tpu_custom_call.1} parent=1 // pred_check_branch
      %210 = sbr.rel (0) target = $region45
    $region44: #{tpu_custom_call.1} parent=1 // pred_region
      _
    $region45: #{tpu_custom_call.1} parent=1 // pred_fallthru
      _
    // Predicated region
    $region46: #{tpu_custom_call.1} parent=1 // pred_check
      _
    $region47: #{tpu_custom_call.1} parent=1 // pred_check_branch
      %212 = sbr.rel (0) target = $region49
    $region48: #{tpu_custom_call.1} parent=1 // pred_region
      %214 = dma.done [#allocation5], 128
    $region49: #{tpu_custom_call.1} parent=1 // pred_fallthru
      _
    // Predicated region
    $region50: #{tpu_custom_call.1} parent=1 // pred_check
      _
    $region51: #{tpu_custom_call.1} parent=1 // pred_check_branch
      %216 = sbr.rel (0) target = $region53
    $region52: #{tpu_custom_call.1} parent=1 // pred_region
      _
    $region53: #{tpu_custom_call.1} parent=1 // pred_fallthru
      _
    %217 = vsyncpa [#allocation4], 1
    %218 = vsyncpa [#allocation9], 1
    %219 = vsyncpa [#allocation5], 1
    %220 = vsyncpa [#allocation6], 1

</llo_original>
